<compile_context>
chip_gen: v5e
topology: v5e:2x2
jax: 0.10.0
libtpu: 0.0.40
codegen_flags: <defaults>
</compile_context>

<pallas_src>
import jax
import jax.numpy as jnp
from jax.experimental import pallas as pl
from jax.experimental.pallas import tpu as pltpu

_LANES = 128


def _value_net_kernel(x_ref, w1_ref, b1_ref, w2_ref, b2_ref, o_ref):
    # x_ref:  [BM, S]     w1_ref: [S, Hp]    b1_ref: [1, Hp]
    # w2_ref: [1, Hp]     b2_ref: [1, 1] (SMEM)
    # o_ref:  [BM, 128]   (lane-dense slab; column 0 is the value)
    x = x_ref[...]

    # fc1 + ReLU: MXU matmul with f32 accumulation, bias + ReLU on the VPU.
    h = jnp.dot(x, w1_ref[...], preferred_element_type=jnp.float32)
    h = jnp.maximum(h + b1_ref[...], 0.0)

    # fc2: N=1 matmul replaced by VPU multiply + cross-lane (XLU) reduction.
    # Padded hidden columns are exactly zero in both h and w2, so the sum is exact.
    v = jnp.sum(h * w2_ref[...], axis=-1, keepdims=True)        # [BM, 1]
    v = v + b2_ref[0, 0]                                        # scalar bias from SMEM

    # Lane-dense store: broadcast the per-row value across the 128-lane slab so
    # the writeback uses full, unmasked vector stores.
    o_ref[...] = jnp.broadcast_to(v, o_ref.shape).astype(o_ref.dtype)


def value_net_forward(x, w1, b1, w2, b2, *, block_b=128):
    """Fused forward pass: relu(x @ w1 + b1) @ w2 + b2.

    x:  [B, n_states] float32
    w1: [n_states, n_hiddens], b1: [n_hiddens]
    w2: [n_hiddens, 1],        b2: [1]
    returns [B, 1] float32
    """
    B, S = x.shape
    H = w1.shape[1]

    # --- layout plumbing (done in the JAX wrapper, outside the kernel) -------
    # Pad hidden dim to a multiple of 128 lanes. Zero-padding w1 columns and b1
    # gives h == 0 on padded lanes after ReLU; w2 padded rows are also zero, so
    # the fc2 reduction is exact.
    Hp = ((H + _LANES - 1) // _LANES) * _LANES
    w1_p = jnp.zeros((S, Hp), jnp.float32).at[:, :H].set(w1)
    b1_p = jnp.zeros((1, Hp), jnp.float32).at[:, :H].set(b1.reshape(1, H))
    w2_row = jnp.zeros((1, Hp), jnp.float32).at[:, :H].set(w2.reshape(1, H))
    b2_s = b2.reshape(1, 1).astype(jnp.float32)

    # Pad batch to a multiple of the batch tile (zero rows; outputs discarded).
    BM = block_b
    B_pad = ((B + BM - 1) // BM) * BM
    x_p = jnp.zeros((B_pad, S), jnp.float32).at[:B, :].set(x)
    nt = B_pad // BM

    out_padded = pl.pallas_call(
        _value_net_kernel,
        out_shape=jax.ShapeDtypeStruct((B_pad, _LANES), jnp.float32),
        grid=(nt,),
        in_specs=[
            pl.BlockSpec((BM, S), lambda i: (i, 0)),          # x: tiled over batch
            pl.BlockSpec((S, Hp), lambda i: (0, 0)),          # w1: resident
            pl.BlockSpec((1, Hp), lambda i: (0, 0)),          # b1: resident
            pl.BlockSpec((1, Hp), lambda i: (0, 0)),          # w2 row: resident
            pl.BlockSpec(memory_space=pltpu.MemorySpace.SMEM),  # b2 scalar
        ],
        out_specs=pl.BlockSpec((BM, _LANES), lambda i: (i, 0)),
        compiler_params=pltpu.CompilerParams(
            dimension_semantics=("parallel",),
        ),
        cost_estimate=pl.CostEstimate(
            flops=2 * B_pad * S * Hp + 3 * B_pad * Hp,
            transcendentals=0,
            bytes_accessed=4 * (B_pad * S + S * Hp + 2 * Hp + 1 + B_pad * _LANES),
        ),
    )(x_p, w1_p, b1_p, w2_row, b2_s)

    # Slice back to the logical [B, 1] result.
    return out_padded[:B, :1]


def init_value_net_params(key, n_states, n_hiddens):
    """Deterministic init mirroring PyTorch nn.Linear default U(-1/sqrt(fan_in), +)."""
    k1, k2, k3, k4 = jax.random.split(key, 4)
    bound1 = 1.0 / jnp.sqrt(n_states)
    bound2 = 1.0 / jnp.sqrt(n_hiddens)
    # stored transposed relative to PyTorch's [out, in] convention
    w1 = jax.random.uniform(k1, (n_states, n_hiddens), jnp.float32, -bound1, bound1)
    b1 = jax.random.uniform(k2, (n_hiddens,), jnp.float32, -bound1, bound1)
    w2 = jax.random.uniform(k3, (n_hiddens, 1), jnp.float32, -bound2, bound2)
    b2 = jax.random.uniform(k4, (1,), jnp.float32, -bound2, bound2)
    return w1, b1, w2, b2


if __name__ == "__main__":
    key = jax.random.PRNGKey(0)
    k_params, k_x = jax.random.split(key)

    batch = 8
    n_states = 16
    n_hiddens = 32

    w1, b1, w2, b2 = init_value_net_params(k_params, n_states, n_hiddens)
    x = jax.random.normal(k_x, (batch, n_states), jnp.float32)

    out = jax.block_until_ready(value_net_forward(x, w1, b1, w2, b2))

    # Reference check in plain JAX (f32 end-to-end, so a tight tolerance holds).
    ref = jnp.maximum(x @ w1 + b1, 0.0) @ w2 + b2
    assert out.shape == (batch, 1)
    assert jnp.allclose(out, ref, atol=1e-5, rtol=1e-5)

    print("KERNEL_OK")
</pallas_src>

<mosaic_0001>
module attributes {stable_mosaic.version = 11 : i64} {
  func.func @_value_net_kernel(%arg0: i32, %arg1: memref<128x16xf32, #tpu.memory_space<vmem>>, %arg2: memref<16x128xf32, #tpu.memory_space<vmem>>, %arg3: memref<1x128xf32, #tpu.memory_space<vmem>>, %arg4: memref<1x128xf32, #tpu.memory_space<vmem>>, %arg5: memref<1x1xf32, #tpu.memory_space<smem>>, %arg6: memref<128x128xf32, #tpu.memory_space<vmem>>) attributes {dimension_semantics = [#tpu.dimension_semantics<parallel>], iteration_bounds = array<i64: 1>, scalar_prefetch = 0 : i64, scratch_operands = 0 : i64, tpu.core_type = #tpu.core_type<tc>, window_params = [{transform_indices = @transform_0, window_bounds = array<i64: 128, 16>}, {pipeline_mode = #tpu.pipeline_mode<synchronous>, transform_indices = @transform_1, window_bounds = array<i64: 16, 128>}, {pipeline_mode = #tpu.pipeline_mode<synchronous>, transform_indices = @transform_2, window_bounds = array<i64: 1, 128>}, {pipeline_mode = #tpu.pipeline_mode<synchronous>, transform_indices = @transform_3, window_bounds = array<i64: 1, 128>}, {transform_indices = @transform_4, window_bounds = array<i64: 1, 1>}, {transform_indices = @transform_5, window_bounds = array<i64: 128, 128>}]} {
    %c0 = arith.constant 0 : index
    %c0_0 = arith.constant 0 : index
    %0 = vector.load %arg1[%c0, %c0_0] : memref<128x16xf32, #tpu.memory_space<vmem>>, vector<128x16xf32>
    %c0_1 = arith.constant 0 : index
    %c0_2 = arith.constant 0 : index
    %1 = vector.load %arg2[%c0_1, %c0_2] : memref<16x128xf32, #tpu.memory_space<vmem>>, vector<16x128xf32>
    %cst = arith.constant dense<0.000000e+00> : vector<128x128xf32>
    %2 = tpu.matmul %0, %1, %cst {dimension_numbers = #tpu.dot_dimension_numbers<[1], [0], [0], [1], [0, 0, 1, 1], [], []>} : vector<128x16xf32>, vector<16x128xf32>, vector<128x128xf32> -> vector<128x128xf32>
    %c0_3 = arith.constant 0 : index
    %c0_4 = arith.constant 0 : index
    %3 = vector.load %arg3[%c0_3, %c0_4] : memref<1x128xf32, #tpu.memory_space<vmem>>, vector<1x128xf32>
    %4 = vector.broadcast %3 : vector<1x128xf32> to vector<128x128xf32>
    %5 = arith.addf %2, %4 : vector<128x128xf32>
    %cst_5 = arith.constant 0.000000e+00 : f32
    %6 = vector.broadcast %cst_5 : f32 to vector<128x128xf32>
    %7 = arith.maximumf %5, %6 : vector<128x128xf32>
    %c0_6 = arith.constant 0 : index
    %c0_7 = arith.constant 0 : index
    %8 = vector.load %arg4[%c0_6, %c0_7] : memref<1x128xf32, #tpu.memory_space<vmem>>, vector<1x128xf32>
    %9 = vector.broadcast %8 : vector<1x128xf32> to vector<128x128xf32>
    %10 = arith.mulf %7, %9 : vector<128x128xf32>
    %cst_8 = arith.constant dense<0.000000e+00> : vector<128xf32>
    %11 = vector.multi_reduction <add>, %10, %cst_8 [1] : vector<128x128xf32> to vector<128xf32>
    %12 = vector.shape_cast %11 : vector<128xf32> to vector<128x1xf32>
    %c0_9 = arith.constant 0 : index
    %c0_10 = arith.constant 0 : index
    %13 = memref.load %arg5[%c0_9, %c0_10] : memref<1x1xf32, #tpu.memory_space<smem>>
    %14 = vector.broadcast %13 : f32 to vector<128x1xf32>
    %15 = arith.addf %12, %14 : vector<128x1xf32>
    %16 = vector.shape_cast %15 : vector<128x1xf32> to vector<128x1xf32>
    %17 = vector.broadcast %16 : vector<128x1xf32> to vector<128x128xf32>
    %c0_11 = arith.constant 0 : index
    %c0_12 = arith.constant 0 : index
    %18 = vector.load %arg6[%c0_11, %c0_12] : memref<128x128xf32, #tpu.memory_space<vmem>>, vector<128x128xf32>
    tpu.vector_store %arg6[%c0_11, %c0_12], %17 {strides = array<i32>} : memref<128x128xf32, #tpu.memory_space<vmem>>, vector<128x128xf32>,
    return
  }
  func.func @transform_0(%arg0: i32) -> (i32, i32) {
    %c0_i32 = arith.constant 0 : i32
    %c0_i32_0 = arith.constant 0 : i32
    return %arg0, %c0_i32 : i32, i32
  }
  func.func @transform_1(%arg0: i32) -> (i32, i32) {
    %c0_i32 = arith.constant 0 : i32
    %c0_i32_0 = arith.constant 0 : i32
    %c0_i32_1 = arith.constant 0 : i32
    return %c0_i32, %c0_i32_0 : i32, i32
  }
  func.func @transform_2(%arg0: i32) -> (i32, i32) {
    %c0_i32 = arith.constant 0 : i32
    %c0_i32_0 = arith.constant 0 : i32
    %c0_i32_1 = arith.constant 0 : i32
    return %c0_i32, %c0_i32_0 : i32, i32
  }
  func.func @transform_3(%arg0: i32) -> (i32, i32) {
    %c0_i32 = arith.constant 0 : i32
    %c0_i32_0 = arith.constant 0 : i32
    %c0_i32_1 = arith.constant 0 : i32
    return %c0_i32, %c0_i32_0 : i32, i32
  }
  func.func @transform_4(%arg0: i32) -> (i32, i32) {
    %c0_i32 = arith.constant 0 : i32
    %c0_i32_0 = arith.constant 0 : i32
    %c0_i32_1 = arith.constant 0 : i32
    return %c0_i32, %c0_i32_0 : i32, i32
  }
  func.func @transform_5(%arg0: i32) -> (i32, i32) {
    %c0_i32 = arith.constant 0 : i32
    %c0_i32_0 = arith.constant 0 : i32
    return %arg0, %c0_i32 : i32, i32
  }
}

</mosaic_0001>

<llo_original>
// kernel: tpu_custom_call.1
$region0: #{tpu_custom_call.1}
  #allocation0 [shape = 'u32[]', space=smem, size = 0x4, offset = 0x4, fixed_abs, tag = 'smem constant byte address 0x4 - core index']
  #allocation1 [shape = 'u32[72,128]{1,0:T(1,128)}', space=vmem, size = 0x9000, scoped, tag = 'internal scratch']
  #allocation2 [shape = 'f32[1,1]{1,0:T(1,128)S(6)}', space=smem, size = 0x200, scoped, tag = 'scoped memory for tpu_custom_call.1']
  %s0 = inlined_call_operand.vmem [shape: f32[128,16], index: 0, kind: input, shape index: {}]
  %s1 = inlined_call_operand.vmem [shape: f32[16,128], index: 1, kind: input, shape index: {}]
  %s2 = inlined_call_operand.vmem [shape: f32[1,128], index: 2, kind: input, shape index: {}]
  %s3 = inlined_call_operand.vmem [shape: f32[1,128], index: 3, kind: input, shape index: {}]
  %s4 = inlined_call_operand.<no memory space> [shape: f32[1,1], index: 4, kind: input, shape index: {}]
  %s5 = inlined_call_operand.hbm [shape: f32[128,128], index: 5, kind: output, shape index: {}]
  %s6 = sld [smem:[#allocation0]]
  $region30: #{tpu_custom_call.1} parent=0
    _
  %s8 = ssub.s32 1, %s6
  %s9 = scalar_select 0, %s8, %s6
  %10 = sst [smem:[#allocation2]] %s4
  $region1: #{tpu_custom_call.1} parent=0
    #allocation3 [shape = 'u8[65536]{0}', space=vmem, size = 0x10000, scoped, tag = 'output window, operand 0, single buffered']
    #allocation4 [shape = 's32[1]{0}', space=sflag, size = 0x4, scoped, tag = 'scoped memory for tpu_custom_call.1']
    %11 = vsyncpa [#allocation4], 0
    // Predicated region
    $region2: #{tpu_custom_call.1} parent=1 // pred_check
      _
    $region3: #{tpu_custom_call.1} parent=1 // pred_check_branch
      %13 = sbr.rel (0) target = $region5
    $region4: #{tpu_custom_call.1} parent=1 // pred_region
      _
    $region5: #{tpu_custom_call.1} parent=1 // pred_fallthru
      _
    // Predicated region
    $region6: #{tpu_custom_call.1} parent=1 // pred_check
      _
    $region7: #{tpu_custom_call.1} parent=1 // pred_check_branch
      %15 = sbr.rel (0) target = $region9
    $region8: #{tpu_custom_call.1} parent=1 // pred_region
      _
    $region9: #{tpu_custom_call.1} parent=1 // pred_fallthru
      _
    // Predicated region
    $region10: #{tpu_custom_call.1} parent=1 // pred_check
      _
    $region11: #{tpu_custom_call.1} parent=1 // pred_check_branch
      %17 = sbr.rel (0) target = $region13
    $region12: #{tpu_custom_call.1} parent=1 // pred_region
      _
    $region13: #{tpu_custom_call.1} parent=1 // pred_fallthru
      _
    // Predicated region
    $region14: #{tpu_custom_call.1} parent=1 // pred_check
      _
    $region15: #{tpu_custom_call.1} parent=1 // pred_check_branch
      %19 = sbr.rel (0) target = $region17
    $region16: #{tpu_custom_call.1} parent=1 // pred_region
      _
    $region17: #{tpu_custom_call.1} parent=1 // pred_fallthru
      _
    // Predicated region
    $region18: #{tpu_custom_call.1} parent=1 // pred_check
      _
    $region19: #{tpu_custom_call.1} parent=1 // pred_check_branch
      %21 = sbr.rel (0) target = $region21
    $region20: #{tpu_custom_call.1} parent=1 // pred_region
      _
    $region21: #{tpu_custom_call.1} parent=1 // pred_fallthru
      _
    %v22 = vld [vmem:[%s0] sm:$0xff]
    %v23 = vld [vmem:[%s0 + $0x8] sm:$0xff]
    %v24 = vld [vmem:[%s0 + $0x10] sm:$0xff]
    %v25 = vld [vmem:[%s0 + $0x18] sm:$0xff]
    %v26 = vld [vmem:[%s0 + $0x20] sm:$0xff]
    %v27 = vld [vmem:[%s0 + $0x28] sm:$0xff]
    %v28 = vld [vmem:[%s0 + $0x30] sm:$0xff]
    %v29 = vld [vmem:[%s0 + $0x38] sm:$0xff]
    %v30 = vld [vmem:[%s0 + $0x40] sm:$0xff]
    %v31 = vld [vmem:[%s0 + $0x48] sm:$0xff]
    %v32 = vld [vmem:[%s0 + $0x50] sm:$0xff]
    %v33 = vld [vmem:[%s0 + $0x58] sm:$0xff]
    %v34 = vld [vmem:[%s0 + $0x60] sm:$0xff]
    %v35 = vld [vmem:[%s0 + $0x68] sm:$0xff]
    %v36 = vld [vmem:[%s0 + $0x70] sm:$0xff]
    %v37 = vld [vmem:[%s0 + $0x78] sm:$0xff]
    %v38 = vld [vmem:[%s1] sm:$0xff]
    %v39 = vld [vmem:[%s1 + $0x8] sm:$0xff]
    %v40 = vld [vmem:[%s2] sm:$0x1]
    %v42 = vperm.slane %v40, 0
    %vm44 = vcmask 130048
    %v46 = vsel %vm44, %v22, 0
    %v49 = vsel %vm44, %v23, 0
    %v52 = vsel %vm44, %v24, 0
    %v55 = vsel %vm44, %v25, 0
    %v58 = vsel %vm44, %v26, 0
    %v61 = vsel %vm44, %v27, 0
    %v64 = vsel %vm44, %v28, 0
    %v67 = vsel %vm44, %v29, 0
    %v70 = vsel %vm44, %v30, 0
    %v73 = vsel %vm44, %v31, 0
    %v76 = vsel %vm44, %v32, 0
    %v79 = vsel %vm44, %v33, 0
    %v82 = vsel %vm44, %v34, 0
    %v85 = vsel %vm44, %v35, 0
    %v88 = vsel %vm44, %v36, 0
    %v91 = vsel %vm44, %v37, 0
    %93 = vmatpush.msra.mxu0 0.0
    %94 = vmatpush.msra.mxu0 0.0
    %95 = vmatpush.msra.mxu0 0.0
    %96 = vmatpush.msra.mxu0 0.0
    %97 = vmatpush.msra.mxu0 0.0
    %98 = vmatpush.msra.mxu0 0.0
    %99 = vmatpush.msra.mxu0 0.0
    %100 = vmatpush.msra.mxu0 0.0
    %101 = vmatpush.msra.mxu0 0.0
    %102 = vmatpush.msra.mxu0 0.0
    %103 = vmatpush.msra.mxu0 0.0
    %104 = vmatpush.msra.mxu0 0.0
    %105 = vmatpush.msra.mxu0 0.0
    %106 = vmatpush.msra.mxu0 0.0
    %107 = vmatpush.msra.mxu0 %v39
    %108 = vmatpush.msra.mxu0 %v38
    %109 = vmatmul.f32.gmra.mxu0 %v46
    %v110 = vpop.f32.mrf.mxu0
    %v111 = vadd.f32 %v42, %v110
    %112 = vmatmul.f32.gmra.mxu0 %v49
    %v113 = vpop.f32.mrf.mxu0
    %v114 = vadd.f32 %v42, %v113
    %115 = vmatmul.f32.gmra.mxu0 %v52
    %v116 = vpop.f32.mrf.mxu0
    %v117 = vadd.f32 %v42, %v116
    %118 = vmatmul.f32.gmra.mxu0 %v55
    %v119 = vpop.f32.mrf.mxu0
    %v120 = vadd.f32 %v42, %v119
    %121 = vmatmul.f32.gmra.mxu0 %v58
    %v122 = vpop.f32.mrf.mxu0
    %v123 = vadd.f32 %v42, %v122
    %124 = vmatmul.f32.gmra.mxu0 %v61
    %v125 = vpop.f32.mrf.mxu0
    %v126 = vadd.f32 %v42, %v125
    %127 = vmatmul.f32.gmra.mxu0 %v64
    %v128 = vpop.f32.mrf.mxu0
    %v129 = vadd.f32 %v42, %v128
    %130 = vmatmul.f32.gmra.mxu0 %v67
    %v131 = vpop.f32.mrf.mxu0
    %v132 = vadd.f32 %v42, %v131
    %133 = vmatmul.f32.gmra.mxu0 %v70
    %v134 = vpop.f32.mrf.mxu0
    %v135 = vadd.f32 %v42, %v134
    %136 = vmatmul.f32.gmra.mxu0 %v73
    %v137 = vpop.f32.mrf.mxu0
    %v138 = vadd.f32 %v42, %v137
    %139 = vmatmul.f32.gmra.mxu0 %v76
    %v140 = vpop.f32.mrf.mxu0
    %v141 = vadd.f32 %v42, %v140
    %142 = vmatmul.f32.gmra.mxu0 %v79
    %v143 = vpop.f32.mrf.mxu0
    %v144 = vadd.f32 %v42, %v143
    %145 = vmatmul.f32.gmra.mxu0 %v82
    %v146 = vpop.f32.mrf.mxu0
    %v147 = vadd.f32 %v42, %v146
    %148 = vmatmul.f32.gmra.mxu0 %v85
    %v149 = vpop.f32.mrf.mxu0
    %v150 = vadd.f32 %v42, %v149
    %151 = vmatmul.f32.gmra.mxu0 %v88
    %v152 = vpop.f32.mrf.mxu0
    %v153 = vadd.f32 %v42, %v152
    %154 = vmatmul.f32.gmra.mxu0 %v91
    %v155 = vpop.f32.mrf.mxu0
    %v156 = vadd.f32 %v42, %v155
    %157 = vdwg.mxu0
    %v158 = vmax.f32 %v111, 0.0
    %v159 = vmax.f32 %v114, 0.0
    %v160 = vmax.f32 %v117, 0.0
    %v161 = vmax.f32 %v120, 0.0
    %v162 = vmax.f32 %v123, 0.0
    %v163 = vmax.f32 %v126, 0.0
    %v164 = vmax.f32 %v129, 0.0
    %v165 = vmax.f32 %v132, 0.0
    %v166 = vmax.f32 %v135, 0.0
    %v167 = vmax.f32 %v138, 0.0
    %v168 = vmax.f32 %v141, 0.0
    %v169 = vmax.f32 %v144, 0.0
    %v170 = vmax.f32 %v147, 0.0
    %v171 = vmax.f32 %v150, 0.0
    %v172 = vmax.f32 %v153, 0.0
    %v173 = vmax.f32 %v156, 0.0
    %v174 = vld [vmem:[%s3] sm:$0x1]
    %v176 = vperm.slane %v174, 0
    %v178 = vmul.f32 %v158, %v176
    %v179 = vmul.f32 %v159, %v176
    %v180 = vmul.f32 %v160, %v176
    %v181 = vmul.f32 %v161, %v176
    %v182 = vmul.f32 %v162, %v176
    %v183 = vmul.f32 %v163, %v176
    %v184 = vmul.f32 %v164, %v176
    %v185 = vmul.f32 %v165, %v176
    %v186 = vmul.f32 %v166, %v176
    %v187 = vmul.f32 %v167, %v176
    %v188 = vmul.f32 %v168, %v176
    %v189 = vmul.f32 %v169, %v176
    %v190 = vmul.f32 %v170, %v176
    %v191 = vmul.f32 %v171, %v176
    %v192 = vmul.f32 %v172, %v176
    %v193 = vmul.f32 %v173, %v176
    %194 = vadd.xlane.f32.xlu0 %v178
    %v195 = vpop.xlane.xlu0 %194
    %196 = vadd.xlane.f32.xlu0 %v179
    %v197 = vpop.xlane.xlu0 %196
    %198 = vadd.xlane.f32.xlu0 %v180
    %v199 = vpop.xlane.xlu0 %198
    %200 = vadd.xlane.f32.xlu0 %v181
    %v201 = vpop.xlane.xlu0 %200
    %202 = vadd.xlane.f32.xlu0 %v182
    %v203 = vpop.xlane.xlu0 %202
    %204 = vadd.xlane.f32.xlu0 %v183
    %v205 = vpop.xlane.xlu0 %204
    %206 = vadd.xlane.f32.xlu0 %v184
    %v207 = vpop.xlane.xlu0 %206
    %208 = vadd.xlane.f32.xlu0 %v185
    %v209 = vpop.xlane.xlu0 %208
    %210 = vadd.xlane.f32.xlu0 %v186
    %v211 = vpop.xlane.xlu0 %210
    %212 = vadd.xlane.f32.xlu0 %v187
    %v213 = vpop.xlane.xlu0 %212
    %214 = vadd.xlane.f32.xlu0 %v188
    %v215 = vpop.xlane.xlu0 %214
    %216 = vadd.xlane.f32.xlu0 %v189
    %v217 = vpop.xlane.xlu0 %216
    %218 = vadd.xlane.f32.xlu0 %v190
    %v219 = vpop.xlane.xlu0 %218
    %220 = vadd.xlane.f32.xlu0 %v191
    %v221 = vpop.xlane.xlu0 %220
    %222 = vadd.xlane.f32.xlu0 %v192
    %v223 = vpop.xlane.xlu0 %222
    %224 = vadd.xlane.f32.xlu0 %v193
    %v225 = vpop.xlane.xlu0 %224
    %s226 = sld [smem:[#allocation2]]
    %v227 = vstv %s226
    %v228 = vadd.f32 %v195, %v227
    %v229 = vadd.f32 %v197, %v227
    %v230 = vadd.f32 %v199, %v227
    %v231 = vadd.f32 %v201, %v227
    %v232 = vadd.f32 %v203, %v227
    %v233 = vadd.f32 %v205, %v227
    %v234 = vadd.f32 %v207, %v227
    %v235 = vadd.f32 %v209, %v227
    %v236 = vadd.f32 %v211, %v227
    %v237 = vadd.f32 %v213, %v227
    %v238 = vadd.f32 %v215, %v227
    %v239 = vadd.f32 %v217, %v227
    %v240 = vadd.f32 %v219, %v227
    %v241 = vadd.f32 %v221, %v227
    %v242 = vadd.f32 %v223, %v227
    %v243 = vadd.f32 %v225, %v227
    %244 = vst [vmem:[#allocation3] sm:$0xff] %v228
    %245 = vst [vmem:[#allocation3 + $0x8] sm:$0xff] %v229
    %246 = vst [vmem:[#allocation3 + $0x10] sm:$0xff] %v230
    %247 = vst [vmem:[#allocation3 + $0x18] sm:$0xff] %v231
    %248 = vst [vmem:[#allocation3 + $0x20] sm:$0xff] %v232
    %249 = vst [vmem:[#allocation3 + $0x28] sm:$0xff] %v233
    %250 = vst [vmem:[#allocation3 + $0x30] sm:$0xff] %v234
    %251 = vst [vmem:[#allocation3 + $0x38] sm:$0xff] %v235
    %252 = vst [vmem:[#allocation3 + $0x40] sm:$0xff] %v236
    %253 = vst [vmem:[#allocation3 + $0x48] sm:$0xff] %v237
    %254 = vst [vmem:[#allocation3 + $0x50] sm:$0xff] %v238
    %255 = vst [vmem:[#allocation3 + $0x58] sm:$0xff] %v239
    %256 = vst [vmem:[#allocation3 + $0x60] sm:$0xff] %v240
    %257 = vst [vmem:[#allocation3 + $0x68] sm:$0xff] %v241
    %258 = vst [vmem:[#allocation3 + $0x70] sm:$0xff] %v242
    %259 = vst [vmem:[#allocation3 + $0x78] sm:$0xff] %v243
    // Predicated region
    $region22: #{tpu_custom_call.1} parent=1 // pred_check
      _
    $region23: #{tpu_custom_call.1} parent=1 // pred_check_branch
      %261 = sbr.rel (0) target = $region25
    $region24: #{tpu_custom_call.1} parent=1 // pred_region
      %263 = vsyncadd [#allocation4], 0
      %s264 = sshll.u32 [#allocation3], 4
      %s265 = int_to_ptr.vmem [resolvable:$true] %s264
      %s266 = sshll.u32 %s5, 4
      %s267 = int_to_ptr.hbm [resolvable:$true] %s266
      %272 = dma.vmem_to_hbm [thread:$0]  %s265, 2048, %s267, [#allocation4], 128, 128, 8
    $region25: #{tpu_custom_call.1} parent=1 // pred_fallthru
      _
    // Predicated region
    $region26: #{tpu_custom_call.1} parent=1 // pred_check
      _
    $region27: #{tpu_custom_call.1} parent=1 // pred_check_branch
      %274 = sbr.rel (0) target = $region29
    $region28: #{tpu_custom_call.1} parent=1 // pred_region
      %276 = dma.done [#allocation4], 2048
    $region29: #{tpu_custom_call.1} parent=1 // pred_fallthru
      _
    %277 = vsyncpa [#allocation4], 1

</llo_original>
